<compile_context>
chip_gen: v7x
topology: tpu7x:2x2x1
jax: 0.10.0
libtpu: 0.0.40
codegen_flags: <defaults>
</compile_context>

<pallas_src>
import functools

import jax
import jax.numpy as jnp
from jax.experimental import pallas as pl
from jax.experimental.pallas import tpu as pltpu


# ------------------------------ helpers -------------------------------------


def _ceil_mult(n, m):
    return ((n + m - 1) // m) * m


def _pick_tile(total, cap):
    # largest multiple of 128 that divides `total` (total is a 128-multiple)
    t = max(128, (min(total, cap) // 128) * 128)
    while total % t:
        t -= 128
    return t


def _layernorm(x, g, b, eps=1e-6):
    mu = jnp.mean(x, axis=-1, keepdims=True)
    var = jnp.mean((x - mu) ** 2, axis=-1, keepdims=True)
    return (x - mu) * jax.lax.rsqrt(var + eps) * g + b


# Exact-GELU via a polynomial erf (Abramowitz & Stegun 7.1.26, |err| < 1.5e-7).
_ERF_P = 0.3275911
_ERF_A = (0.254829592, -0.284496736, 1.421413741, -1.453152027, 1.061405429)


def _erf_poly(x):
    a1, a2, a3, a4, a5 = _ERF_A
    ax = jnp.abs(x)
    t = 1.0 / (1.0 + _ERF_P * ax)
    poly = ((((a5 * t + a4) * t + a3) * t + a2) * t + a1) * t
    y = 1.0 - poly * jnp.exp(-ax * ax)
    return jnp.where(x >= 0, y, -y)


def _gelu_exact(x):
    # TODO(synk): evaluate the erf polynomial in bf16 on v6e/v7x (bf16 VALU/EUP)
    # to halve elementwise width; keep f32 on v5e (no bf16 VALU).
    return 0.5 * x * (1.0 + _erf_poly(x * 0.7071067811865476))


def _vmem_limit_bytes():
    # Generation-aware: ~108 MiB on v5e/v6e (128 MiB physical), ~54 MiB on v7x.
    cap = 64 * 1024 * 1024
    try:
        cap = int(pltpu.get_tpu_info().vmem_capacity_bytes)
    except Exception:
        pass
    return max(48 * 1024 * 1024, int(cap * 0.85))


_COMPILER_PARAMS = pltpu.CompilerParams(
    dimension_semantics=("parallel",),
    vmem_limit_bytes=_vmem_limit_bytes(),
)


def _const_weight_spec(shape):
    # Constant block index across the grid -> single-buffer the weight tensors
    # (halves weight VMEM vs the default double-buffering).
    idx = lambda *_: (0,) * len(shape)
    try:
        return pl.BlockSpec(shape, idx, pipeline_mode=pl.Buffered(1))
    except Exception:  # older API without pipeline_mode: fall back gracefully
        return pl.BlockSpec(shape, idx)


# ------------------------------ kernels -------------------------------------


def matmul_bias_kernel(x_ref, w_ref, b_ref, o_ref):
    # o = x @ w + b   (patch embedding over im2col'ed patches; bf16 MXU, f32 acc)
    x = x_ref[...].astype(jnp.bfloat16)
    o_ref[...] = (
        jnp.dot(x, w_ref[...], preferred_element_type=jnp.float32) + b_ref[...]
    )


def block_kernel(x_ref, *refs, num_heads, t_real, kv_tile, tok_tile, with_norm):
    if with_norm:
        (ln1_g, ln1_b, w_qkv, b_qkv, w_proj, b_proj,
         ln2_g, ln2_b, w_fc1, b_fc1, w_fc2, b_fc2,
         norm_g, norm_b, o_ref, on_ref) = refs
    else:
        (ln1_g, ln1_b, w_qkv, b_qkv, w_proj, b_proj,
         ln2_g, ln2_b, w_fc1, b_fc1, w_fc2, b_fc2, o_ref) = refs

    bf16 = jnp.bfloat16
    x = x_ref[0].astype(jnp.float32)              # (T, D); bf16 residual in HBM
    T, D = x.shape
    hd = D // num_heads

    # --- attention: LN1 + fused QKV (1/sqrt(hd) pre-folded into Q weights) ---
    h = _layernorm(x, ln1_g[...], ln1_b[...])
    qkv = (jnp.dot(h.astype(bf16), w_qkv[...],
                   preferred_element_type=jnp.float32) + b_qkv[...])

    def _heads(a):                                # (T, D) f32 -> (H, T, hd) bf16
        return a.reshape(T, num_heads, hd).swapaxes(0, 1).astype(bf16)

    q = _heads(qkv[:, :D])
    k = _heads(qkv[:, D:2 * D])
    v = _heads(qkv[:, 2 * D:])

    # additive key-padding bias, hoisted once out of the KV loop (f32, pre-cast)
    key_bias = jnp.where(
        jax.lax.broadcasted_iota(jnp.int32, (1, 1, T), 2) < t_real, 0.0, -1e30)

    # flash-style online softmax over KV tiles: never materialize (H, T, T)
    m_run = jnp.full((num_heads, T, 1), -jnp.inf, jnp.float32)
    l_run = jnp.zeros((num_heads, T, 1), jnp.float32)
    acc = jnp.zeros((num_heads, T, hd), jnp.float32)
    for c in range(T // kv_tile):
        cs = c * kv_tile
        k_c = k[:, cs:cs + kv_tile]               # (H, kv_tile, hd) bf16
        v_c = v[:, cs:cs + kv_tile]
        s = jnp.einsum("hqd,hkd->hqk", q, k_c,
                       preferred_element_type=jnp.float32)
        s = s + key_bias[:, :, cs:cs + kv_tile]
        m_new = jnp.maximum(m_run, jnp.max(s, axis=-1, keepdims=True))
        alpha = jnp.exp(m_run - m_new)
        p = jnp.exp(s - m_new)
        l_run = alpha * l_run + jnp.sum(p, axis=-1, keepdims=True)
        acc = alpha * acc + jnp.einsum("hqk,hkd->hqd", p.astype(bf16), v_c,
                                       preferred_element_type=jnp.float32)
        m_run = m_new

    attn = acc * pl.reciprocal(l_run, approx=True)        # (H, T, hd) f32
    attn = attn.swapaxes(0, 1).reshape(T, D)              # heads -> lane dim
    x = x + (jnp.dot(attn.astype(bf16), w_proj[...],
                     preferred_element_type=jnp.float32) + b_proj[...])

    # --- MLP, token-tiled: only (tok_tile, 4D) live; chunk-wise lane-dense stores
    for c in range(T // tok_tile):
        cs = c * tok_tile
        xc = x[cs:cs + tok_tile]
        h2 = _layernorm(xc, ln2_g[...], ln2_b[...])
        m = (jnp.dot(h2.astype(bf16), w_fc1[...],
                     preferred_element_type=jnp.float32) + b_fc1[...])
        m = _gelu_exact(m)                         # exact (erf) GELU, f32
        yc = xc + (jnp.dot(m.astype(bf16), w_fc2[...],
                           preferred_element_type=jnp.float32) + b_fc2[...])
        o_ref[0, cs:cs + tok_tile, :] = yc.astype(o_ref.dtype)
        if with_norm:
            # fused final LayerNorm for collected intermediate outputs (f32)
            on_ref[0, cs:cs + tok_tile, :] = _layernorm(yc, norm_g[...], norm_b[...])


# ------------------------------ wrappers ------------------------------------


def matmul_bias(x, w_bf16, b):
    M, K = x.shape
    N = w_bf16.shape[1]
    # large M tiles amortise the ~0.35us per-grid-step overhead (~85% HBM roofline)
    tm = min(1024, _ceil_mult(M, 8))
    Mp = _ceil_mult(M, tm)
    if Mp != M:
        x = jnp.pad(x, ((0, Mp - M), (0, 0)))
    out = pl.pallas_call(
        matmul_bias_kernel,
        out_shape=jax.ShapeDtypeStruct((Mp, N), jnp.float32),
        grid=(Mp // tm,),
        in_specs=[
            pl.BlockSpec((tm, K), lambda i: (i, 0)),
            _const_weight_spec((K, N)),
            _const_weight_spec((1, N)),
        ],
        out_specs=pl.BlockSpec((tm, N), lambda i: (i, 0)),
        compiler_params=_COMPILER_PARAMS,
        cost_estimate=pl.CostEstimate(
            flops=int(2 * Mp * K * N), transcendentals=0,
            bytes_accessed=int(4 * Mp * K + 2 * K * N + 4 * Mp * N)),
    )(x, w_bf16, b)
    return out[:M]


def run_block(x, blk, num_heads, t_real, final_norm=None):
    """One fused transformer block per batch element (grid over B, megacore-parallel)."""
    B, T, D = x.shape
    with_norm = final_norm is not None
    weights = [blk[kname] for kname in (
        "ln1_g", "ln1_b", "w_qkv", "b_qkv", "w_proj", "b_proj",
        "ln2_g", "ln2_b", "w_fc1", "b_fc1", "w_fc2", "b_fc2")]
    if with_norm:
        weights = weights + [final_norm[0], final_norm[1]]

    tok_spec = pl.BlockSpec((1, T, D), lambda bi: (bi, 0, 0))
    in_specs = [tok_spec] + [_const_weight_spec(w.shape) for w in weights]

    kv_tile = _pick_tile(T, 512)    # flash KV tile: only (H, T, kv_tile) scores live
    tok_tile = _pick_tile(T, 256)   # MLP token tile: only (tok_tile, 4D) live

    # bf16 residual carry between blocks; fused final-LN output stays f32
    out_shape = jax.ShapeDtypeStruct((B, T, D), jnp.bfloat16)
    out_specs = tok_spec
    if with_norm:
        # TODO(synk): emit only the t_real rows (patch/cls split) to skip storing
        # and re-reading padded rows for the collected outputs.
        out_shape = (out_shape, jax.ShapeDtypeStruct((B, T, D), jnp.float32))
        out_specs = (tok_spec, pl.BlockSpec((1, T, D), lambda bi: (bi, 0, 0)))

    mlp = blk["w_fc1"].shape[1]
    flops = int(B * (8 * T * D * D + 4 * T * T * D + 4 * T * D * mlp))
    trans = int(B * (num_heads * T * T + T * mlp))
    byts = int(2 * B * T * D + 2 * B * T * D
               + (4 * B * T * D if with_norm else 0)
               + 2 * (4 * D * D + 2 * D * mlp) + 4 * (9 * D + mlp))

    # TODO(synk): add a q-tile grid axis and cross-call (P10) prefetch of the next
    # block's MLP weights to hide per-block weight DMA when B is small / odd.
    return pl.pallas_call(
        functools.partial(block_kernel, num_heads=num_heads, t_real=t_real,
                          kv_tile=kv_tile, tok_tile=tok_tile, with_norm=with_norm),
        out_shape=out_shape,
        grid=(B,),
        in_specs=in_specs,
        out_specs=out_specs,
        compiler_params=_COMPILER_PARAMS,
        cost_estimate=pl.CostEstimate(flops=flops, transcendentals=trans,
                                      bytes_accessed=byts),
    )(x, *weights)


# ------------------------ model (get_intermediate_layers) -------------------


def init_params(key, C, ps, D, depth, num_heads, H, W, mlp_ratio=4):
    nP = (H // ps) * (W // ps)
    keys = jax.random.split(key, 4 + depth)
    s = 0.02
    f32, bf16 = jnp.float32, jnp.bfloat16
    hd = D // num_heads
    qscale = 1.0 / float(hd) ** 0.5
    params = dict(
        patch_size=ps,
        depth=depth,
        # matmul weights stored in bf16 (MXU operands); biases / LN params in f32
        w_patch=(s * jax.random.normal(keys[0], (C * ps * ps, D), f32)).astype(bf16),
        b_patch=jnp.zeros((1, D), f32),
        cls_token=s * jax.random.normal(keys[1], (1, 1, D), f32),
        pos_embed=s * jax.random.normal(keys[2], (1, 1 + nP, D), f32),
        norm_g=jnp.ones((1, D), f32),
        norm_b=jnp.zeros((1, D), f32),
        blocks=[],
    )
    for d in range(depth):
        bk = jax.random.split(keys[4 + d], 4)
        w_qkv = s * jax.random.normal(bk[0], (D, 3 * D), f32)
        b_qkv = jnp.zeros((1, 3 * D), f32)
        # fold 1/sqrt(head_dim) into the Q third of the QKV projection (free at init)
        w_qkv = w_qkv.at[:, :D].multiply(qscale)
        b_qkv = b_qkv.at[:, :D].multiply(qscale)
        params["blocks"].append(dict(
            ln1_g=jnp.ones((1, D), f32), ln1_b=jnp.zeros((1, D), f32),
            w_qkv=w_qkv.astype(bf16), b_qkv=b_qkv,
            w_proj=(s * jax.random.normal(bk[1], (D, D), f32)).astype(bf16),
            b_proj=jnp.zeros((1, D), f32),
            ln2_g=jnp.ones((1, D), f32), ln2_b=jnp.zeros((1, D), f32),
            w_fc1=(s * jax.random.normal(bk[2], (D, mlp_ratio * D), f32)).astype(bf16),
            b_fc1=jnp.zeros((1, mlp_ratio * D), f32),
            w_fc2=(s * jax.random.normal(bk[3], (mlp_ratio * D, D), f32)).astype(bf16),
            b_fc2=jnp.zeros((1, D), f32),
        ))
    return params


def model_with_intermediate_layers(images, params, n_last_blocks, num_heads):
    """Equivalent of ModelWithIntermediateLayers.forward (inference)."""
    B, C, H, W = images.shape
    ps = params["patch_size"]
    depth = params["depth"]
    D = params["w_patch"].shape[1]
    assert D % num_heads == 0
    nP = (H // ps) * (W // ps)
    t_real = 1 + nP
    # pad the token axis to a multiple of 128: lane-dense loads/stores, clean
    # bf16 packing, and it makes the in-kernel KV / token tiling exact.
    t_pad = _ceil_mult(t_real, 128)

    # Patch embedding: conv(stride=patch) == im2col + Pallas matmul (bf16 MXU).
    x = images.reshape(B, C, H // ps, ps, W // ps, ps)
    x = x.transpose(0, 2, 4, 1, 3, 5).reshape(B * nP, C * ps * ps)
    patches = matmul_bias(x, params["w_patch"], params["b_patch"]).reshape(B, nP, D)

    # prepend cls token, add positional embedding, pad token axis, bf16 carry
    cls = jnp.broadcast_to(params["cls_token"], (B, 1, D))
    tokens = jnp.concatenate([cls, patches], axis=1) + params["pos_embed"]
    tokens = jnp.pad(tokens, ((0, 0), (0, t_pad - t_real), (0, 0)))
    tokens = tokens.astype(jnp.bfloat16)

    take_from = depth - n_last_blocks
    final_norm = (params["norm_g"], params["norm_b"])
    results = []
    for i, blk in enumerate(params["blocks"]):
        if i >= take_from:
            # final LayerNorm fused into the block kernel as a second (f32) output
            tokens, normed = run_block(tokens, blk, num_heads, t_real,
                                       final_norm=final_norm)
            results.append((normed[:, 1:t_real, :], normed[:, 0, :]))
        else:
            tokens = run_block(tokens, blk, num_heads, t_real)
    return tuple(results)


# --------------------------------- main --------------------------------------


if __name__ == "__main__":
    key = jax.random.PRNGKey(0)
    B, C, H, W = 2, 3, 16, 16
    patch_size, D, depth, num_heads, n_last_blocks = 8, 32, 4, 2, 2

    params = init_params(key, C, patch_size, D, depth, num_heads, H, W)
    images = jax.random.normal(
        jax.random.fold_in(key, 999), (B, C, H, W), jnp.float32)

    feats = model_with_intermediate_layers(images, params, n_last_blocks, num_heads)
    feats = jax.block_until_ready(feats)

    nP = (H // patch_size) * (W // patch_size)
    assert len(feats) == n_last_blocks
    for patch_tok, cls_tok in feats:
        assert patch_tok.shape == (B, nP, D)
        assert cls_tok.shape == (B, D)
        assert patch_tok.dtype == jnp.float32 and cls_tok.dtype == jnp.float32
        assert bool(jnp.all(jnp.isfinite(patch_tok))) and bool(jnp.all(jnp.isfinite(cls_tok)))

    print("KERNEL_OK")
</pallas_src>

<mosaic_0001>
module attributes {stable_mosaic.version = 11 : i64} {
  func.func @matmul_bias_kernel(%arg0: i32, %arg1: memref<8x192xf32, #tpu.memory_space<vmem>>, %arg2: memref<192x32xbf16, #tpu.memory_space<vmem>>, %arg3: memref<1x32xf32, #tpu.memory_space<vmem>>, %arg4: memref<8x32xf32, #tpu.memory_space<vmem>>) attributes {dimension_semantics = [#tpu.dimension_semantics<parallel>], iteration_bounds = array<i64: 1>, scalar_prefetch = 0 : i64, scratch_operands = 0 : i64, tpu.core_type = #tpu.core_type<tc>, window_params = [{transform_indices = @transform_0, window_bounds = array<i64: 8, 192>}, {pipeline_mode = #tpu.pipeline_mode<synchronous>, transform_indices = @transform_1, window_bounds = array<i64: 192, 32>}, {pipeline_mode = #tpu.pipeline_mode<synchronous>, transform_indices = @transform_2, window_bounds = array<i64: 1, 32>}, {transform_indices = @transform_3, window_bounds = array<i64: 8, 32>}]} {
    %c0 = arith.constant 0 : index
    %c0_0 = arith.constant 0 : index
    %0 = vector.load %arg1[%c0, %c0_0] : memref<8x192xf32, #tpu.memory_space<vmem>>, vector<8x192xf32>
    %1 = arith.truncf %0 : vector<8x192xf32> to vector<8x192xbf16>
    %c0_1 = arith.constant 0 : index
    %c0_2 = arith.constant 0 : index
    %2 = vector.load %arg2[%c0_1, %c0_2] : memref<192x32xbf16, #tpu.memory_space<vmem>>, vector<192x32xbf16>
    %cst = arith.constant dense<0.000000e+00> : vector<8x32xf32>
    %3 = tpu.matmul %1, %2, %cst {dimension_numbers = #tpu.dot_dimension_numbers<[1], [0], [0], [1], [0, 0, 1, 1], [], []>} : vector<8x192xbf16>, vector<192x32xbf16>, vector<8x32xf32> -> vector<8x32xf32>
    %c0_3 = arith.constant 0 : index
    %c0_4 = arith.constant 0 : index
    %4 = vector.load %arg3[%c0_3, %c0_4] : memref<1x32xf32, #tpu.memory_space<vmem>>, vector<1x32xf32>
    %5 = vector.broadcast %4 : vector<1x32xf32> to vector<8x32xf32>
    %6 = arith.addf %3, %5 : vector<8x32xf32>
    %c0_5 = arith.constant 0 : index
    %c0_6 = arith.constant 0 : index
    %7 = vector.load %arg4[%c0_5, %c0_6] : memref<8x32xf32, #tpu.memory_space<vmem>>, vector<8x32xf32>
    tpu.vector_store %arg4[%c0_5, %c0_6], %6 {strides = array<i32>} : memref<8x32xf32, #tpu.memory_space<vmem>>, vector<8x32xf32>,
    return
  }
  func.func @transform_0(%arg0: i32) -> (i32, i32) {
    %c0_i32 = arith.constant 0 : i32
    %c0_i32_0 = arith.constant 0 : i32
    return %arg0, %c0_i32 : i32, i32
  }
  func.func @transform_1(%arg0: i32) -> (i32, i32) {
    %c0_i32 = arith.constant 0 : i32
    %c0_i32_0 = arith.constant 0 : i32
    %c0_i32_1 = arith.constant 0 : i32
    return %c0_i32, %c0_i32_0 : i32, i32
  }
  func.func @transform_2(%arg0: i32) -> (i32, i32) {
    %c0_i32 = arith.constant 0 : i32
    %c0_i32_0 = arith.constant 0 : i32
    %c0_i32_1 = arith.constant 0 : i32
    return %c0_i32, %c0_i32_0 : i32, i32
  }
  func.func @transform_3(%arg0: i32) -> (i32, i32) {
    %c0_i32 = arith.constant 0 : i32
    %c0_i32_0 = arith.constant 0 : i32
    return %arg0, %c0_i32 : i32, i32
  }
}

</mosaic_0001>

<llo_original>
// kernel: tpu_custom_call.1
$region0: #{tpu_custom_call.1}
  #allocation0 [shape = 'u32[]', space=smem, size = 0x4, offset = 0x4, fixed_abs, tag = 'smem constant byte address 0x4 - core index']
  #allocation1 [shape = 'u32[144,128]{1,0:T(1,128)}', space=vmem, size = 0x12000, scoped, tag = 'internal scratch']
  %s0 = inlined_call_operand.vmem [shape: f32[8,192], index: 0, kind: input, shape index: {}]
  %s1 = inlined_call_operand.vmem [shape: bf16[192,32], index: 1, kind: input, shape index: {}]
  %s2 = inlined_call_operand.vmem [shape: f32[1,32], index: 2, kind: input, shape index: {}]
  %s3 = inlined_call_operand.hbm [shape: f32[8,32], index: 3, kind: output, shape index: {}]
  %s4 = sld [smem:[#allocation0]]
  $region22: #{tpu_custom_call.1} parent=0
    _
  %s6 = ssub.s32 1, %s4
  %s7 = scalar_select 0, %s6, %s4
  $region1: #{tpu_custom_call.1} parent=0
    #allocation2 [shape = 'u8[4096]{0}', space=vmem, size = 0x1000, scoped, tag = 'output window, operand 0, single buffered']
    #allocation3 [shape = 's32[1]{0}', space=sflag, size = 0x4, scoped, tag = 'scoped memory for tpu_custom_call.1']
    %8 = vsyncpa [#allocation3], 0
    // Predicated region
    $region2: #{tpu_custom_call.1} parent=1 // pred_check
      _
    $region3: #{tpu_custom_call.1} parent=1 // pred_check_branch
      %10 = sbr.rel (0) target = $region5
    $region4: #{tpu_custom_call.1} parent=1 // pred_region
      _
    $region5: #{tpu_custom_call.1} parent=1 // pred_fallthru
      _
    // Predicated region
    $region6: #{tpu_custom_call.1} parent=1 // pred_check
      _
    $region7: #{tpu_custom_call.1} parent=1 // pred_check_branch
      %12 = sbr.rel (0) target = $region9
    $region8: #{tpu_custom_call.1} parent=1 // pred_region
      _
    $region9: #{tpu_custom_call.1} parent=1 // pred_fallthru
      _
    // Predicated region
    $region10: #{tpu_custom_call.1} parent=1 // pred_check
      _
    $region11: #{tpu_custom_call.1} parent=1 // pred_check_branch
      %14 = sbr.rel (0) target = $region13
    $region12: #{tpu_custom_call.1} parent=1 // pred_region
      _
    $region13: #{tpu_custom_call.1} parent=1 // pred_fallthru
      _
    %v16 = vld [vmem:[%s0] sm:$0xff]
    %v17 = vld [vmem:[%s0 + $0x8] sm:$0xff]
    %v18 = vpack.c.bf16 %v16, %v16
    %v19 = vpack.c.bf16 %v17, %v17
    %v20 = vld [vmem:[%s1] sm:$0xf]
    %v21 = vld [vmem:[%s1 + $0x4] sm:$0xf]
    %v22 = vld [vmem:[%s1 + $0x8] sm:$0xf]
    %v23 = vld [vmem:[%s1 + $0xc] sm:$0xf]
    %v24 = vld [vmem:[%s1 + $0x10] sm:$0xf]
    %v25 = vld [vmem:[%s1 + $0x14] sm:$0xf]
    %v26 = vld [vmem:[%s1 + $0x18] sm:$0xf]
    %v27 = vld [vmem:[%s1 + $0x1c] sm:$0xf]
    %v28 = vld [vmem:[%s1 + $0x20] sm:$0xf]
    %v29 = vld [vmem:[%s1 + $0x24] sm:$0xf]
    %v30 = vld [vmem:[%s1 + $0x28] sm:$0xf]
    %v31 = vld [vmem:[%s1 + $0x2c] sm:$0xf]
    %v32 = vld [vmem:[%s1 + $0x30] sm:$0xf]
    %v33 = vld [vmem:[%s1 + $0x34] sm:$0xf]
    %v34 = vld [vmem:[%s1 + $0x38] sm:$0xf]
    %v35 = vld [vmem:[%s1 + $0x3c] sm:$0xf]
    %v36 = vld [vmem:[%s1 + $0x40] sm:$0xf]
    %v37 = vld [vmem:[%s1 + $0x44] sm:$0xf]
    %v38 = vld [vmem:[%s1 + $0x48] sm:$0xf]
    %v39 = vld [vmem:[%s1 + $0x4c] sm:$0xf]
    %v40 = vld [vmem:[%s1 + $0x50] sm:$0xf]
    %v41 = vld [vmem:[%s1 + $0x54] sm:$0xf]
    %v42 = vld [vmem:[%s1 + $0x58] sm:$0xf]
    %v43 = vld [vmem:[%s1 + $0x5c] sm:$0xf]
    %v44 = vld [vmem:[%s2] sm:$0x1]
    %v46 = vlaneseq
    %v47 = vshrl.u32 %v46, 7
    %v48 = vsub.s32 0, %v47
    %v49 = vrot.slane %v44, %v48
    %v75 = vunpack.c.l.b16 %v20
    %v76 = vunpack.c.l.b16 %v21
    %v77 = vunpack.c.l.b16 %v22
    %v78 = vunpack.c.l.b16 %v23
    %v79 = vunpack.c.l.b16 %v24
    %v80 = vunpack.c.l.b16 %v25
    %v81 = vunpack.c.l.b16 %v26
    %v82 = vunpack.c.l.b16 %v27
    %v83 = vunpack.c.l.b16 %v28
    %v84 = vunpack.c.l.b16 %v29
    %v85 = vunpack.c.l.b16 %v30
    %v86 = vunpack.c.l.b16 %v31
    %v87 = vunpack.c.l.b16 %v32
    %v88 = vunpack.c.l.b16 %v33
    %v89 = vunpack.c.l.b16 %v34
    %v90 = vunpack.c.l.b16 %v35
    %v91 = vunpack.c.l.b16 %v36
    %v92 = vunpack.c.l.b16 %v37
    %v93 = vunpack.c.l.b16 %v38
    %v94 = vunpack.c.l.b16 %v39
    %v95 = vunpack.c.l.b16 %v40
    %v96 = vunpack.c.l.b16 %v41
    %v97 = vunpack.c.l.b16 %v42
    %v98 = vunpack.c.l.b16 %v43
    %v99 = vpack.c.b16 %v76, %v75
    %v100 = vpack.c.b16 %v78, %v77
    %v101 = vpack.c.b16 %v80, %v79
    %v102 = vpack.c.b16 %v82, %v81
    %v103 = vpack.c.b16 %v84, %v83
    %v104 = vpack.c.b16 %v86, %v85
    %v105 = vpack.c.b16 %v88, %v87
    %v106 = vpack.c.b16 %v90, %v89
    %v107 = vpack.c.b16 %v92, %v91
    %v108 = vpack.c.b16 %v94, %v93
    %v109 = vpack.c.b16 %v96, %v95
    %v110 = vpack.c.b16 %v98, %v97
    %vm123 = vcmask 523264
    %v125 = vsel %vm123, %v19, 0
    %127 = vmatprep.subr.bf16.mxu0 0
    %128 = vmatpush1.bf16.msra.mxu0 %v99
    %129 = vmatprep.subr.bf16.mxu0 0
    %130 = vmatpush1.bf16.msra.mxu0 %v100
    %131 = vmatprep.subr.bf16.mxu0 0
    %132 = vmatpush1.bf16.msra.mxu0 %v101
    %133 = vmatprep.subr.bf16.mxu0 0
    %134 = vmatpush1.bf16.msra.mxu0 %v102
    %135 = vmatprep.subr.bf16.mxu0 0
    %136 = vmatpush1.bf16.msra.mxu0 %v103
    %137 = vmatprep.subr.bf16.mxu0 0
    %138 = vmatpush1.bf16.msra.mxu0 %v104
    %139 = vmatprep.subr.bf16.mxu0 0
    %140 = vmatpush1.bf16.msra.mxu0 %v105
    %141 = vmatprep.subr.bf16.mxu0 0
    %142 = vmatpush1.bf16.msra.mxu0 %v106
    %143 = vmatprep.subr.bf16.mxu0 0
    %144 = vmatpush1.bf16.msra.mxu0 %v107
    %145 = vmatprep.subr.bf16.mxu0 0
    %146 = vmatpush1.bf16.msra.mxu0 %v108
    %147 = vmatprep.subr.bf16.mxu0 0
    %148 = vmatpush1.bf16.msra.mxu0 %v109
    %149 = vmatprep.subr.bf16.mxu0 0
    %150 = vmatpush1.bf16.msra.mxu0 %v110
    %151 = vmatprep.subr.bf16.mxu0 0
    %152 = vmatpush1.bf16.msra.mxu0 0
    %153 = vmatprep.subr.bf16.mxu0 0
    %154 = vmatpush1.bf16.msra.mxu0 0
    %155 = vmatprep.subr.bf16.mxu0 0
    %156 = vmatpush1.bf16.msra.mxu0 0
    %157 = vmatprep.subr.bf16.mxu0 0
    %158 = vmatpush1.bf16.msra.mxu0 0
    %159 = vmatprep.mubr.bf16.mxu0 %v125
    %160 = vmatmul.mubr.bf16.gmra.mrb[0].mxu0 %v18
    %v161 = vpop.f32.mrb[0].mxu0
    %v162 = vadd.f32 %v49, %v161
    %v163 = vpop.f32.mrb[0].mxu0
    %v164 = vpop.f32.mrb[0].mxu0
    %v165 = vpop.f32.mrb[0].mxu0
    %166 = vdwg.mxu0
    %vm167 = vcmask 261120
    %168 = vst.msk [vmem:[#allocation2] sm:$0xff] %vm167, %v162
    // Predicated region
    $region14: #{tpu_custom_call.1} parent=1 // pred_check
      _
    $region15: #{tpu_custom_call.1} parent=1 // pred_check_branch
      %170 = sbr.rel (0) target = $region17
    $region16: #{tpu_custom_call.1} parent=1 // pred_region
      %s172 = ssub.s32 128, 128
      %173 = vsyncadd [#allocation3], %s172
      %s175 = sshll.u32 [#allocation2], 4
      %s176 = int_to_ptr.vmem [resolvable:$true] %s175
      %178 = dma.vmem_to_hbm [thread:$0]  %s176, 128, %s3, [#allocation3]
    $region17: #{tpu_custom_call.1} parent=1 // pred_fallthru
      _
    // Predicated region
    $region18: #{tpu_custom_call.1} parent=1 // pred_check
      _
    $region19: #{tpu_custom_call.1} parent=1 // pred_check_branch
      %180 = sbr.rel (0) target = $region21
    $region20: #{tpu_custom_call.1} parent=1 // pred_region
      %181 = dma.done [#allocation3], 128
    $region21: #{tpu_custom_call.1} parent=1 // pred_fallthru
      _
    %182 = vsyncpa [#allocation3], 1

</llo_original>
